<compile_context>
chip_gen: v7x
topology: tpu7x:2x2x1
jax: 0.10.0
libtpu: 0.0.40
codegen_flags: <defaults>
</compile_context>

<pallas_src>
import functools

import jax
import jax.numpy as jnp
from jax import lax
from jax.experimental import pallas as pl
from jax.experimental.pallas import tpu as pltpu


def _round_up(a: int, b: int) -> int:
    return (a + b - 1) // b * b


# ---------------------------------------------------------------------------
# support = x @ W   (row-tiled dense matmul, bf16 in -> bf16 out, f32 MXU acc)
# ---------------------------------------------------------------------------
def _support_kernel(x_ref, w_ref, out_ref):
    out_ref[...] = jnp.dot(
        x_ref[...], w_ref[...], preferred_element_type=jnp.float32
    ).astype(out_ref.dtype)


def _x_matmul(x, w, *, tm):
    n, f = x.shape
    hp = w.shape[1]
    return pl.pallas_call(
        _support_kernel,
        out_shape=jax.ShapeDtypeStruct((n, hp), jnp.bfloat16),
        grid_spec=pltpu.PrefetchScalarGridSpec(
            num_scalar_prefetch=0,
            grid=(n // tm,),
            in_specs=[
                pl.BlockSpec((tm, f), lambda i: (i, 0)),   # row tile of x
                pl.BlockSpec((f, hp), lambda i: (0, 0)),   # full weight, resident
            ],
            out_specs=pl.BlockSpec((tm, hp), lambda i: (i, 0)),
        ),
        compiler_params=pltpu.CompilerParams(
            dimension_semantics=("parallel",),
            vmem_limit_bytes=48 * 1024 * 1024,
        ),
    )(x, w)


# ---------------------------------------------------------------------------
# out = epilogue(adj @ support + b)
#   grid = (row tiles, k tiles); f32 accumulator in VMEM scratch; the epilogue
#   (bias, optional ReLU, optional masked log_softmax) runs on the last k only,
#   so the (tm, 128) lane-dense output is stored exactly once per row tile.
# ---------------------------------------------------------------------------
def _agg_kernel(adj_ref, sup_ref, b_ref, out_ref, acc_ref, *,
                tk, nvalid, relu, logsoftmax):
    k = pl.program_id(1)

    @pl.when(k == 0)
    def _init():
        acc_ref[...] = jnp.zeros_like(acc_ref)

    off = pl.multiple_of(k * tk, tk)
    sup = sup_ref[pl.ds(off, tk), :]                     # slice of resident support
    acc_ref[...] += jnp.dot(adj_ref[...], sup, preferred_element_type=jnp.float32)

    @pl.when(k == pl.num_programs(1) - 1)
    def _epilogue():
        z = acc_ref[...] + b_ref[...]
        if relu:
            z = jnp.maximum(z, 0.0)
        if logsoftmax:
            # log_softmax over the real class columns only (rest are zero padding).
            cols = lax.broadcasted_iota(jnp.int32, z.shape, 1)
            valid = cols < nvalid
            zm = jnp.where(valid, z, -jnp.inf)
            m = jnp.max(zm, axis=1, keepdims=True)
            shifted = zm - m
            lse = jnp.log(jnp.sum(jnp.where(valid, jnp.exp(shifted), 0.0),
                                  axis=1, keepdims=True))
            z = jnp.where(valid, shifted - lse, 0.0)
        out_ref[...] = z.astype(out_ref.dtype)


def _graph_conv(adj, support, bias, *, tm, tk, out_dtype, nvalid,
                relu=False, logsoftmax=False):
    npad = adj.shape[0]
    hp = support.shape[1]
    kernel = functools.partial(
        _agg_kernel, tk=tk, nvalid=nvalid, relu=relu, logsoftmax=logsoftmax)
    return pl.pallas_call(
        kernel,
        out_shape=jax.ShapeDtypeStruct((npad, hp), out_dtype),
        grid_spec=pltpu.PrefetchScalarGridSpec(
            num_scalar_prefetch=0,
            grid=(npad // tm, npad // tk),
            in_specs=[
                pl.BlockSpec((tm, tk), lambda i, k: (i, k)),     # adj tile (streamed)
                pl.BlockSpec((npad, hp), lambda i, k: (0, 0)),   # support (resident)
                pl.BlockSpec((1, hp), lambda i, k: (0, 0)),      # bias (resident)
            ],
            out_specs=pl.BlockSpec((tm, hp), lambda i, k: (i, 0)),
            scratch_shapes=[pltpu.VMEM((tm, hp), jnp.float32)],
        ),
        compiler_params=pltpu.CompilerParams(
            dimension_semantics=("parallel", "arbitrary"),
            vmem_limit_bytes=48 * 1024 * 1024,
        ),
    )(adj, support, bias)


def gcn_forward(x, adj, w1, b1, w2, b2, *, tm=256, tk=256):
    """Inference forward of pygcn GCN. Returns (N, nclass) float32 log-probs."""
    n, nfeat = x.shape
    nhid = w1.shape[1]
    nclass = w2.shape[1]

    hp = _round_up(max(nhid, 128), 128)     # lane-dense hidden width
    cp = _round_up(max(nclass, 128), 128)   # lane-dense class width
    npad = _round_up(n, max(tm, tk))

    # Layout plumbing (wrapper side): pad to tile/lane multiples, cast streams to bf16.
    x_p = jnp.zeros((npad, nfeat), jnp.bfloat16).at[:n, :].set(x.astype(jnp.bfloat16))
    adj_p = jnp.zeros((npad, npad), jnp.bfloat16).at[:n, :n].set(adj.astype(jnp.bfloat16))
    w1_p = jnp.zeros((nfeat, hp), jnp.bfloat16).at[:, :nhid].set(w1.astype(jnp.bfloat16))
    b1_p = jnp.zeros((1, hp), jnp.float32).at[:, :nhid].set(
        b1.reshape(1, -1).astype(jnp.float32))
    w2_p = jnp.zeros((hp, cp), jnp.bfloat16).at[:nhid, :nclass].set(w2.astype(jnp.bfloat16))
    b2_p = jnp.zeros((1, cp), jnp.float32).at[:, :nclass].set(
        b2.reshape(1, -1).astype(jnp.float32))

    # ---- layer 1: relu(adj @ (x @ W1) + b1) ----
    sup1 = _x_matmul(x_p, w1_p, tm=tm)
    h = _graph_conv(adj_p, sup1, b1_p, tm=tm, tk=tk, out_dtype=jnp.bfloat16,
                    nvalid=nhid, relu=True)

    # ---- dropout: identity at inference (training=False) ----
    # TODO(synk): training-mode dropout would use pltpu.prng_seed + pltpu.stateful_bernoulli.

    # ---- layer 2: log_softmax(adj @ (h @ W2) + b2, axis=1) ----
    sup2 = _x_matmul(h, w2_p, tm=tm)
    z = _graph_conv(adj_p, sup2, b2_p, tm=tm, tk=tk, out_dtype=jnp.float32,
                    nvalid=nclass, logsoftmax=True)

    return z[:n, :nclass]


def _ref_forward(x, adj, w1, b1, w2, b2):
    h = jnp.maximum(adj @ (x @ w1) + b1, 0.0)
    z = adj @ (h @ w2) + b2
    return jax.nn.log_softmax(z, axis=1)


if __name__ == "__main__":
    # Small-but-non-trivial shapes: 512 nodes -> a 2x2 grid of 256x256 adj tiles.
    N, nfeat, nhid, nclass = 512, 64, 16, 8
    dropout = 0.5  # unused at inference

    key = jax.random.PRNGKey(0)
    kx, kadj, kw1, kb1, kw2, kb2 = jax.random.split(key, 6)

    x = jax.random.normal(kx, (N, nfeat), dtype=jnp.float32)

    # Symmetric normalized adjacency with self-loops: D^-1/2 (A + I) D^-1/2.
    a = (jax.random.uniform(kadj, (N, N)) > 0.98).astype(jnp.float32)
    a = jnp.maximum(a, a.T) + jnp.eye(N, dtype=jnp.float32)
    dinv = 1.0 / jnp.sqrt(a.sum(axis=1))
    adj = a * dinv[:, None] * dinv[None, :]

    # pygcn GraphConvolution.reset_parameters: U(-stdv, stdv), stdv = 1/sqrt(out_features)
    stdv1 = 1.0 / jnp.sqrt(float(nhid))
    stdv2 = 1.0 / jnp.sqrt(float(nclass))
    w1 = jax.random.uniform(kw1, (nfeat, nhid), minval=-stdv1, maxval=stdv1, dtype=jnp.float32)
    b1 = jax.random.uniform(kb1, (1, nhid), minval=-stdv1, maxval=stdv1, dtype=jnp.float32)
    w2 = jax.random.uniform(kw2, (nhid, nclass), minval=-stdv2, maxval=stdv2, dtype=jnp.float32)
    b2 = jax.random.uniform(kb2, (1, nclass), minval=-stdv2, maxval=stdv2, dtype=jnp.float32)

    out = jax.block_until_ready(gcn_forward(x, adj, w1, b1, w2, b2))
    ref = _ref_forward(x, adj, w1, b1, w2, b2)

    assert out.shape == (N, nclass)
    # adj / x / h / W are streamed in bf16 (accumulation stays f32) -> loosened tolerance.
    max_err = float(jnp.max(jnp.abs(out - ref)))
    assert max_err < 7.5e-2, f"max abs err {max_err}"

    print("KERNEL_OK")
</pallas_src>

<mosaic_0001>
module attributes {stable_mosaic.version = 11 : i64} {
  func.func @_support_kernel(%arg0: i32, %arg1: memref<256x64xbf16, #tpu.memory_space<vmem>>, %arg2: memref<64x128xbf16, #tpu.memory_space<vmem>>, %arg3: memref<256x128xbf16, #tpu.memory_space<vmem>>) attributes {dimension_semantics = [#tpu.dimension_semantics<parallel>], iteration_bounds = array<i64: 2>, scalar_prefetch = 0 : i64, scratch_operands = 0 : i64, tpu.core_type = #tpu.core_type<tc>, window_params = [{transform_indices = @transform_0, window_bounds = array<i64: 256, 64>}, {pipeline_mode = #tpu.pipeline_mode<synchronous>, transform_indices = @transform_1, window_bounds = array<i64: 64, 128>}, {transform_indices = @transform_2, window_bounds = array<i64: 256, 128>}]} {
    %c0 = arith.constant 0 : index
    %c0_0 = arith.constant 0 : index
    %0 = vector.load %arg1[%c0, %c0_0] : memref<256x64xbf16, #tpu.memory_space<vmem>>, vector<256x64xbf16>
    %c0_1 = arith.constant 0 : index
    %c0_2 = arith.constant 0 : index
    %1 = vector.load %arg2[%c0_1, %c0_2] : memref<64x128xbf16, #tpu.memory_space<vmem>>, vector<64x128xbf16>
    %cst = arith.constant dense<0.000000e+00> : vector<256x128xf32>
    %2 = tpu.matmul %0, %1, %cst {dimension_numbers = #tpu.dot_dimension_numbers<[1], [0], [0], [1], [0, 0, 1, 1], [], []>} : vector<256x64xbf16>, vector<64x128xbf16>, vector<256x128xf32> -> vector<256x128xf32>
    %3 = arith.truncf %2 : vector<256x128xf32> to vector<256x128xbf16>
    %c0_3 = arith.constant 0 : index
    %c0_4 = arith.constant 0 : index
    %4 = vector.load %arg3[%c0_3, %c0_4] : memref<256x128xbf16, #tpu.memory_space<vmem>>, vector<256x128xbf16>
    tpu.vector_store %arg3[%c0_3, %c0_4], %3 {strides = array<i32>} : memref<256x128xbf16, #tpu.memory_space<vmem>>, vector<256x128xbf16>,
    return
  }
  func.func @transform_0(%arg0: i32) -> (i32, i32) {
    %c0_i32 = arith.constant 0 : i32
    %c0_i32_0 = arith.constant 0 : i32
    return %arg0, %c0_i32 : i32, i32
  }
  func.func @transform_1(%arg0: i32) -> (i32, i32) {
    %c0_i32 = arith.constant 0 : i32
    %c0_i32_0 = arith.constant 0 : i32
    %c0_i32_1 = arith.constant 0 : i32
    return %c0_i32, %c0_i32_0 : i32, i32
  }
  func.func @transform_2(%arg0: i32) -> (i32, i32) {
    %c0_i32 = arith.constant 0 : i32
    %c0_i32_0 = arith.constant 0 : i32
    return %arg0, %c0_i32 : i32, i32
  }
}

</mosaic_0001>

<llo_original>
// kernel: tpu_custom_call.1
$region0: #{tpu_custom_call.1}
  #allocation0 [shape = 'u32[]', space=smem, size = 0x4, offset = 0x4, fixed_abs, tag = 'smem constant byte address 0x4 - core index']
  #allocation1 [shape = 'u32[144,128]{1,0:T(1,128)}', space=vmem, size = 0x12000, scoped, tag = 'internal scratch']
  %s0 = inlined_call_operand.vmem [shape: bf16[512,64], index: 0, kind: input, shape index: {}]
  %s1 = inlined_call_operand.vmem [shape: bf16[64,128], index: 1, kind: input, shape index: {}]
  %s2 = inlined_call_operand.hbm [shape: bf16[512,128], index: 2, kind: output, shape index: {}]
  %s3 = sld [smem:[#allocation0]]
  $region41: #{tpu_custom_call.1} parent=0
    _
  %s5 = ssub.s32 1, %s3
  %s6 = scalar_select 0, %s5, %s3
  $region1: #{tpu_custom_call.1} parent=0
    #allocation2 [shape = 'u8[131072]{0}', space=vmem, size = 0x20000, scoped, tag = 'output window, operand 0']
    #allocation3 [shape = 's32[2]{0}', space=sflag, size = 0x8, scoped, tag = 'scoped memory for tpu_custom_call.1']
    %7 = vsyncpa [#allocation3], 0
    %s8 = scalar_lea.sflag [#allocation3], 1
    %9 = vsyncpa %s8, 0
    loop: start=0, step=1, limit=4
    $region2: #{tpu_custom_call.1} parent=1 // loop_pre_header
      _
    $region3: #{tpu_custom_call.1} parent=1 // loop_header
      %s11 = sphi 0, %s15
      %p12 = scmp.ge.s32.totalorder %s11, 4
      %s21 = sphi 0, %s23
      %s24 = sphi 0, %s21
      %s25 = sphi 0, %s24
      %s41 = sphi 0, %s25
      %s45 = sphi 0, %s45
      %s47 = sphi 0, %s45
      %s48 = sphi 0, %s47
      %s62 = sphi 0, %s48
      %s68 = sphi 0, %s70
      %s71 = sphi 0, %s68
      %s72 = sphi 0, %s71
      %s88 = sphi 0, %s72
    $region4: #{tpu_custom_call.1} parent=1 // loop_header_branch
      %14 = sbr.rel (%p12) target = $region8
    $region5: #{tpu_custom_call.1} parent=1 // loop_body
      %s16 = ssub.s32 %s11, 1
      %s17 = ssub.s32 %s11, 2
      %s18 = sadd.s32 %s11, 1
      %s19 = ssub.s32 %s11, %s18
      %p20 = scmp.eq.s32.totalorder %s19, 0
      %s22 = sadd.s32 %s21, 1
      %s23 = scalar_select %p20, %s21, %s22
      %p26 = pneg %p20
      %p27 = scmp.eq.s32.totalorder %s11, 1
      %p28 = por %p26, %p27
      %p29 = scmp.ne.s32.totalorder %s21, %s24
      %p30 = scmp.eq.s32.totalorder %s11, 0
      %p31 = por %p29, %p30
      %p32 = scmp.ne.s32.totalorder %s21, %s24
      %p33 = scmp.eq.s32.totalorder %s16, 1
      %p34 = por %p32, %p33
      %p35 = scmp.ne.s32.totalorder %s24, %s25
      %p36 = scmp.eq.s32.totalorder %s16, 0
      %p37 = por %p35, %p36
      %p38 = scmp.ne.s32.totalorder %s24, %s25
      %p39 = scmp.eq.s32.totalorder %s17, 1
      %p40 = por %p38, %p39
      %p42 = scmp.ne.s32.totalorder %s25, %s41
      %p43 = scmp.eq.s32.totalorder %s17, 0
      %p44 = por %p42, %p43
      %s46 = sadd.s32 %s45, 1
      %p49 = scmp.eq.s32.totalorder %s11, 1
      %p50 = scmp.ne.s32.totalorder %s45, %s47
      %p51 = scmp.eq.s32.totalorder %s11, 0
      %p52 = por %p50, %p51
      %p53 = scmp.ne.s32.totalorder %s45, %s47
      %p54 = scmp.eq.s32.totalorder %s16, 1
      %p55 = por %p53, %p54
      %p56 = scmp.ne.s32.totalorder %s47, %s48
      %p57 = scmp.eq.s32.totalorder %s16, 0
      %p58 = por %p56, %p57
      %p59 = scmp.ne.s32.totalorder %s47, %s48
      %p60 = scmp.eq.s32.totalorder %s17, 1
      %p61 = por %p59, %p60
      %p63 = scmp.ne.s32.totalorder %s48, %s62
      %p64 = scmp.eq.s32.totalorder %s17, 0
      %p65 = por %p63, %p64
      %s66 = ssub.s32 %s11, %s18
      %p67 = scmp.eq.s32.totalorder %s66, 0
      %s69 = sadd.s32 %s68, 1
      %s70 = scalar_select %p67, %s68, %s69
      %p73 = pneg %p67
      %p74 = scmp.eq.s32.totalorder %s11, 1
      %p75 = por %p73, %p74
      %p76 = scmp.ne.s32.totalorder %s68, %s71
      %p77 = scmp.eq.s32.totalorder %s11, 0
      %p78 = por %p76, %p77
      %p79 = scmp.ne.s32.totalorder %s68, %s71
      %p80 = scmp.eq.s32.totalorder %s16, 1
      %p81 = por %p79, %p80
      %p82 = scmp.ne.s32.totalorder %s71, %s72
      %p83 = scmp.eq.s32.totalorder %s16, 0
      %p84 = por %p82, %p83
      %p85 = scmp.ne.s32.totalorder %s71, %s72
      %p86 = scmp.eq.s32.totalorder %s17, 1
      %p87 = por %p85, %p86
      %p89 = scmp.ne.s32.totalorder %s72, %s88
      %p90 = scmp.eq.s32.totalorder %s17, 0
      %p91 = por %p89, %p90
      %p92 = scmp.le.s32.totalorder 1, %s11
      %p93 = scmp.lt.s32.totalorder %s11, 3
      %p94 = pnand %p92, %p93
      %p95 = pneg %p94
      // Predicated region
      $region9: #{tpu_custom_call.1} parent=5 // pred_check
        _
      $region10: #{tpu_custom_call.1} parent=5 // pred_check_branch
        %97 = sbr.rel (%p94) target = $region12
      $region11: #{tpu_custom_call.1} parent=5 // pred_region
        %s98 = ssub.s32 %s11, 1
        // Predicated region
        $region13: #{tpu_custom_call.1} parent=11 // pred_check
          %p99 = pneg %p58
        $region14: #{tpu_custom_call.1} parent=11 // pred_check_branch
          %101 = sbr.rel (%p99) target = $region16
        $region15: #{tpu_custom_call.1} parent=11 // pred_region
          _
        $region16: #{tpu_custom_call.1} parent=11 // pred_fallthru
          _
      $region12: #{tpu_custom_call.1} parent=5 // pred_fallthru
        _
      %p102 = scmp.lt.s32.totalorder %s11, 2
      // Predicated region
      $region17: #{tpu_custom_call.1} parent=5 // pred_check
        %p103 = pneg %p102
      $region18: #{tpu_custom_call.1} parent=5 // pred_check_branch
        %105 = sbr.rel (%p103) target = $region20
      $region19: #{tpu_custom_call.1} parent=5 // pred_region
        // Predicated region
        $region21: #{tpu_custom_call.1} parent=19 // pred_check
          %p106 = pneg %p31
        $region22: #{tpu_custom_call.1} parent=19 // pred_check_branch
          %108 = sbr.rel (%p106) target = $region24
        $region23: #{tpu_custom_call.1} parent=19 // pred_region
          %s109 = smul.u32 32, %s11
          %p110 = scmp.lt.s32.totalorder %s109, 63
          %s111 = scalar_select %p110, %s109, 63
          %s112 = smul.addr %s111, 4
          %s113 = scalar_lea.vmem %s0, %s112
          %s114 = smul.u32 32, %s11
        $region24: #{tpu_custom_call.1} parent=19 // pred_fallthru
          _
      $region20: #{tpu_custom_call.1} parent=5 // pred_fallthru
        _
      %p115 = scmp.le.s32.totalorder 1, %s11
      %p116 = scmp.lt.s32.totalorder %s11, 3
      %p117 = pnand %p115, %p116
      %p118 = pneg %p117
      // Predicated region
      $region25: #{tpu_custom_call.1} parent=5 // pred_check
        _
      $region26: #{tpu_custom_call.1} parent=5 // pred_check_branch
        %120 = sbr.rel (%p117) target = $region28
      $region27: #{tpu_custom_call.1} parent=5 // pred_region
        %s121 = ssub.s32 %s11, 1
        %s122 = smul.u32 32, %s16
        %p123 = scmp.lt.s32.totalorder %s122, 63
        %s124 = scalar_select %p123, %s122, 63
        %s125 = smul.addr %s124, 4
        %s126 = scalar_lea.vmem %s0, %s125
        %p127 = pneg %p37
        %p128 = pneg %p34
        %p129 = pneg %p58
        %p130 = pneg %p55
        %p131 = pneg %p84
        %p132 = pneg %p81
        %s133 = sand.u32 %s71, 1
        %s134 = scalar_lea.sflag [#allocation3], %s133
        %s135 = sand.u32 %s71, 1
        %s136 = smul.addr %s135, 128
        %s137 = scalar_lea.vmem [#allocation2], %s136
        %s138 = smul.u32 32, %s16
        %p139 = scmp.lt.s32.totalorder %s138, 63
        %s140 = scalar_select %p139, %s138, 63
        %s141 = smul.addr %s140, 4
        %s142 = scalar_lea.vmem %s0, %s141
        %s143 = smul.u32 32, %s16
        %s144 = smul.u32 32, %s16
        %v146 = vld [vmem:[%s142] sm:$0xf]
        %v147 = vld [vmem:[%s142 + $0x4] sm:$0xf]
        %v148 = vld [vmem:[%s142 + $0x8] sm:$0xf]
        %v149 = vld [vmem:[%s142 + $0xc] sm:$0xf]
        %v150 = vld [vmem:[%s142 + $0x10] sm:$0xf]
        %v151 = vld [vmem:[%s142 + $0x14] sm:$0xf]
        %v152 = vld [vmem:[%s142 + $0x18] sm:$0xf]
        %v153 = vld [vmem:[%s142 + $0x1c] sm:$0xf]
        %v154 = vld [vmem:[%s142 + $0x20] sm:$0xf]
        %v155 = vld [vmem:[%s142 + $0x24] sm:$0xf]
        %v156 = vld [vmem:[%s142 + $0x28] sm:$0xf]
        %v157 = vld [vmem:[%s142 + $0x2c] sm:$0xf]
        %v158 = vld [vmem:[%s142 + $0x30] sm:$0xf]
        %v159 = vld [vmem:[%s142 + $0x34] sm:$0xf]
        %v160 = vld [vmem:[%s142 + $0x38] sm:$0xf]
        %v161 = vld [vmem:[%s142 + $0x3c] sm:$0xf]
        %v162 = vld [vmem:[%s142 + $0x40] sm:$0xf]
        %v163 = vld [vmem:[%s142 + $0x44] sm:$0xf]
        %v164 = vld [vmem:[%s142 + $0x48] sm:$0xf]
        %v165 = vld [vmem:[%s142 + $0x4c] sm:$0xf]
        %v166 = vld [vmem:[%s142 + $0x50] sm:$0xf]
        %v167 = vld [vmem:[%s142 + $0x54] sm:$0xf]
        %v168 = vld [vmem:[%s142 + $0x58] sm:$0xf]
        %v169 = vld [vmem:[%s142 + $0x5c] sm:$0xf]
        %v170 = vld [vmem:[%s142 + $0x60] sm:$0xf]
        %v171 = vld [vmem:[%s142 + $0x64] sm:$0xf]
        %v172 = vld [vmem:[%s142 + $0x68] sm:$0xf]
        %v173 = vld [vmem:[%s142 + $0x6c] sm:$0xf]
        %v174 = vld [vmem:[%s142 + $0x70] sm:$0xf]
        %v175 = vld [vmem:[%s142 + $0x74] sm:$0xf]
        %v176 = vld [vmem:[%s142 + $0x78] sm:$0xf]
        %v177 = vld [vmem:[%s142 + $0x7c] sm:$0xf]
        %v178 = vld [vmem:[%s1] sm:$0xf]
        %v179 = vld [vmem:[%s1 + $0x4] sm:$0xf]
        %v180 = vld [vmem:[%s1 + $0x8] sm:$0xf]
        %v181 = vld [vmem:[%s1 + $0xc] sm:$0xf]
        %v182 = vld [vmem:[%s1 + $0x10] sm:$0xf]
        %v183 = vld [vmem:[%s1 + $0x14] sm:$0xf]
        %v184 = vld [vmem:[%s1 + $0x18] sm:$0xf]
        %v185 = vld [vmem:[%s1 + $0x1c] sm:$0xf]
        %v218 = vunpack.c.l.b16 %v146
        %v219 = vunpack.c.l.b16 %v147
        %v220 = vunpack.c.l.b16 %v148
        %v221 = vunpack.c.l.b16 %v149
        %v222 = vunpack.c.l.b16 %v150
        %v223 = vunpack.c.l.b16 %v151
        %v224 = vunpack.c.l.b16 %v152
        %v225 = vunpack.c.l.b16 %v153
        %v226 = vunpack.c.l.b16 %v154
        %v227 = vunpack.c.l.b16 %v155
        %v228 = vunpack.c.l.b16 %v156
        %v229 = vunpack.c.l.b16 %v157
        %v230 = vunpack.c.l.b16 %v158
        %v231 = vunpack.c.l.b16 %v159
        %v232 = vunpack.c.l.b16 %v160
        %v233 = vunpack.c.l.b16 %v161
        %v234 = vunpack.c.l.b16 %v162
        %v235 = vunpack.c.l.b16 %v163
        %v236 = vunpack.c.l.b16 %v164
        %v237 = vunpack.c.l.b16 %v165
        %v238 = vunpack.c.l.b16 %v166
        %v239 = vunpack.c.l.b16 %v167
        %v240 = vunpack.c.l.b16 %v168
        %v241 = vunpack.c.l.b16 %v169
        %v242 = vunpack.c.l.b16 %v170
        %v243 = vunpack.c.l.b16 %v171
        %v244 = vunpack.c.l.b16 %v172
        %v245 = vunpack.c.l.b16 %v173
        %v246 = vunpack.c.l.b16 %v174
        %v247 = vunpack.c.l.b16 %v175
        %v248 = vunpack.c.l.b16 %v176
        %v249 = vunpack.c.l.b16 %v177
        %v250 = vpack.c.b16 %v219, %v218
        %v251 = vpack.c.b16 %v221, %v220
        %v252 = vpack.c.b16 %v223, %v222
        %v253 = vpack.c.b16 %v225, %v224
        %v254 = vpack.c.b16 %v227, %v226
        %v255 = vpack.c.b16 %v229, %v228
        %v256 = vpack.c.b16 %v231, %v230
        %v257 = vpack.c.b16 %v233, %v232
        %v258 = vpack.c.b16 %v235, %v234
        %v259 = vpack.c.b16 %v237, %v236
        %v260 = vpack.c.b16 %v239, %v238
        %v261 = vpack.c.b16 %v241, %v240
        %v262 = vpack.c.b16 %v243, %v242
        %v263 = vpack.c.b16 %v245, %v244
        %v264 = vpack.c.b16 %v247, %v246
        %v265 = vpack.c.b16 %v249, %v248
        %v274 = vunpack.c.l.b16 %v178
        %v275 = vunpack.c.l.b16 %v179
        %v276 = vunpack.c.l.b16 %v180
        %v277 = vunpack.c.l.b16 %v181
        %v278 = vunpack.c.l.b16 %v182
        %v279 = vunpack.c.l.b16 %v183
        %v280 = vunpack.c.l.b16 %v184
        %v281 = vunpack.c.l.b16 %v185
        %v282 = vpack.c.b16 %v275, %v274
        %v283 = vpack.c.b16 %v277, %v276
        %v284 = vpack.c.b16 %v279, %v278
        %v285 = vpack.c.b16 %v281, %v280
        %vm290 = vcmask 523264
        %v292 = vsel %vm290, %v250, 0
        %v295 = vsel %vm290, %v251, 0
        %v298 = vsel %vm290, %v252, 0
        %v301 = vsel %vm290, %v253, 0
        %v304 = vsel %vm290, %v254, 0
        %v307 = vsel %vm290, %v255, 0
        %v310 = vsel %vm290, %v256, 0
        %v313 = vsel %vm290, %v257, 0
        %v316 = vsel %vm290, %v258, 0
        %v319 = vsel %vm290, %v259, 0
        %v322 = vsel %vm290, %v260, 0
        %v325 = vsel %vm290, %v261, 0
        %v328 = vsel %vm290, %v262, 0
        %v331 = vsel %vm290, %v263, 0
        %v334 = vsel %vm290, %v264, 0
        %v337 = vsel %vm290, %v265, 0
        %339 = vmatprep.subr.bf16.mxu0 0
        %340 = vmatpush1.bf16.msra.mxu0 %v282
        %341 = vmatprep.subr.bf16.mxu0 0
        %342 = vmatpush1.bf16.msra.mxu0 %v283
        %343 = vmatprep.subr.bf16.mxu0 0
        %344 = vmatpush1.bf16.msra.mxu0 %v284
        %345 = vmatprep.subr.bf16.mxu0 0
        %346 = vmatpush1.bf16.msra.mxu0 %v285
        %347 = vmatprep.subr.bf16.mxu0 0
        %348 = vmatpush1.bf16.msra.mxu0 0
        %349 = vmatprep.subr.bf16.mxu0 0
        %350 = vmatpush1.bf16.msra.mxu0 0
        %351 = vmatprep.subr.bf16.mxu0 0
        %352 = vmatpush1.bf16.msra.mxu0 0
        %353 = vmatprep.subr.bf16.mxu0 0
        %354 = vmatpush1.bf16.msra.mxu0 0
        %355 = vmatprep.subr.bf16.mxu0 0
        %356 = vmatpush1.bf16.msra.mxu0 0
        %357 = vmatprep.subr.bf16.mxu0 0
        %358 = vmatpush1.bf16.msra.mxu0 0
        %359 = vmatprep.subr.bf16.mxu0 0
        %360 = vmatpush1.bf16.msra.mxu0 0
        %361 = vmatprep.subr.bf16.mxu0 0
        %362 = vmatpush1.bf16.msra.mxu0 0
        %363 = vmatprep.subr.bf16.mxu0 0
        %364 = vmatpush1.bf16.msra.mxu0 0
        %365 = vmatprep.subr.bf16.mxu0 0
        %366 = vmatpush1.bf16.msra.mxu0 0
        %367 = vmatprep.subr.bf16.mxu0 0
        %368 = vmatpush1.bf16.msra.mxu0 0
        %369 = vmatprep.subr.bf16.mxu0 0
        %370 = vmatpush1.bf16.msra.mxu0 0
        %371 = vmatprep.mubr.bf16.mxu0 0
        %372 = vmatmul.mubr.bf16.gmra.mrb[0].mxu0 %v292
        %v373 = vpop.f32.mrb[0].mxu0
        %v374 = vadd.f32 0.0, %v373
        %v375 = vpop.f32.mrb[0].mxu0
        %v376 = vpop.f32.mrb[0].mxu0
        %v377 = vadd.f32 0.0, %v376
        %v378 = vpop.f32.mrb[0].mxu0
        %379 = vmatprep.mubr.bf16.mxu0 0
        %380 = vmatmul.mubr.bf16.gmra.mrb[0].mxu0 %v295
        %v381 = vpop.f32.mrb[0].mxu0
        %v382 = vadd.f32 0.0, %v381
        %v383 = vpop.f32.mrb[0].mxu0
        %v384 = vpop.f32.mrb[0].mxu0
        %v385 = vadd.f32 0.0, %v384
        %v386 = vpop.f32.mrb[0].mxu0
        %387 = vmatprep.mubr.bf16.mxu0 0
        %388 = vmatmul.mubr.bf16.gmra.mrb[0].mxu0 %v298
        %v389 = vpop.f32.mrb[0].mxu0
        %v390 = vadd.f32 0.0, %v389
        %v391 = vpop.f32.mrb[0].mxu0
        %v392 = vpop.f32.mrb[0].mxu0
        %v393 = vadd.f32 0.0, %v392
        %v394 = vpop.f32.mrb[0].mxu0
        %395 = vmatprep.mubr.bf16.mxu0 0
        %396 = vmatmul.mubr.bf16.gmra.mrb[0].mxu0 %v301
        %v397 = vpop.f32.mrb[0].mxu0
        %v398 = vadd.f32 0.0, %v397
        %v399 = vpop.f32.mrb[0].mxu0
        %v400 = vpop.f32.mrb[0].mxu0
        %v401 = vadd.f32 0.0, %v400
        %v402 = vpop.f32.mrb[0].mxu0
        %403 = vmatprep.mubr.bf16.mxu0 0
        %404 = vmatmul.mubr.bf16.gmra.mrb[0].mxu0 %v304
        %v405 = vpop.f32.mrb[0].mxu0
        %v406 = vadd.f32 0.0, %v405
        %v407 = vpop.f32.mrb[0].mxu0
        %v408 = vpop.f32.mrb[0].mxu0
        %v409 = vadd.f32 0.0, %v408
        %v410 = vpop.f32.mrb[0].mxu0
        %411 = vmatprep.mubr.bf16.mxu0 0
        %412 = vmatmul.mubr.bf16.gmra.mrb[0].mxu0 %v307
        %v413 = vpop.f32.mrb[0].mxu0
        %v414 = vadd.f32 0.0, %v413
        %v415 = vpop.f32.mrb[0].mxu0
        %v416 = vpop.f32.mrb[0].mxu0
        %v417 = vadd.f32 0.0, %v416
        %v418 = vpop.f32.mrb[0].mxu0
        %419 = vmatprep.mubr.bf16.mxu0 0
        %420 = vmatmul.mubr.bf16.gmra.mrb[0].mxu0 %v310
        %v421 = vpop.f32.mrb[0].mxu0
        %v422 = vadd.f32 0.0, %v421
        %v423 = vpop.f32.mrb[0].mxu0
        %v424 = vpop.f32.mrb[0].mxu0
        %v425 = vadd.f32 0.0, %v424
        %v426 = vpop.f32.mrb[0].mxu0
        %427 = vmatprep.mubr.bf16.mxu0 0
        %428 = vmatmul.mubr.bf16.gmra.mrb[0].mxu0 %v313
        %v429 = vpop.f32.mrb[0].mxu0
        %v430 = vadd.f32 0.0, %v429
        %v431 = vpop.f32.mrb[0].mxu0
        %v432 = vpop.f32.mrb[0].mxu0
        %v433 = vadd.f32 0.0, %v432
        %v434 = vpop.f32.mrb[0].mxu0
        %435 = vmatprep.mubr.bf16.mxu0 0
        %436 = vmatmul.mubr.bf16.gmra.mrb[0].mxu0 %v316
        %v437 = vpop.f32.mrb[0].mxu0
        %v438 = vadd.f32 0.0, %v437
        %v439 = vpop.f32.mrb[0].mxu0
        %v440 = vpop.f32.mrb[0].mxu0
        %v441 = vadd.f32 0.0, %v440
        %v442 = vpop.f32.mrb[0].mxu0
        %443 = vmatprep.mubr.bf16.mxu0 0
        %444 = vmatmul.mubr.bf16.gmra.mrb[0].mxu0 %v319
        %v445 = vpop.f32.mrb[0].mxu0
        %v446 = vadd.f32 0.0, %v445
        %v447 = vpop.f32.mrb[0].mxu0
        %v448 = vpop.f32.mrb[0].mxu0
        %v449 = vadd.f32 0.0, %v448
        %v450 = vpop.f32.mrb[0].mxu0
        %451 = vmatprep.mubr.bf16.mxu0 0
        %452 = vmatmul.mubr.bf16.gmra.mrb[0].mxu0 %v322
        %v453 = vpop.f32.mrb[0].mxu0
        %v454 = vadd.f32 0.0, %v453
        %v455 = vpop.f32.mrb[0].mxu0
        %v456 = vpop.f32.mrb[0].mxu0
        %v457 = vadd.f32 0.0, %v456
        %v458 = vpop.f32.mrb[0].mxu0
        %459 = vmatprep.mubr.bf16.mxu0 0
        %460 = vmatmul.mubr.bf16.gmra.mrb[0].mxu0 %v325
        %v461 = vpop.f32.mrb[0].mxu0
        %v462 = vadd.f32 0.0, %v461
        %v463 = vpop.f32.mrb[0].mxu0
        %v464 = vpop.f32.mrb[0].mxu0
        %v465 = vadd.f32 0.0, %v464
        %v466 = vpop.f32.mrb[0].mxu0
        %467 = vmatprep.mubr.bf16.mxu0 0
        %468 = vmatmul.mubr.bf16.gmra.mrb[0].mxu0 %v328
        %v469 = vpop.f32.mrb[0].mxu0
        %v470 = vadd.f32 0.0, %v469
        %v471 = vpop.f32.mrb[0].mxu0
        %v472 = vpop.f32.mrb[0].mxu0
        %v473 = vadd.f32 0.0, %v472
        %v474 = vpop.f32.mrb[0].mxu0
        %475 = vmatprep.mubr.bf16.mxu0 0
        %476 = vmatmul.mubr.bf16.gmra.mrb[0].mxu0 %v331
        %v477 = vpop.f32.mrb[0].mxu0
        %v478 = vadd.f32 0.0, %v477
        %v479 = vpop.f32.mrb[0].mxu0
        %v480 = vpop.f32.mrb[0].mxu0
        %v481 = vadd.f32 0.0, %v480
        %v482 = vpop.f32.mrb[0].mxu0
        %483 = vmatprep.mubr.bf16.mxu0 0
        %484 = vmatmul.mubr.bf16.gmra.mrb[0].mxu0 %v334
        %v485 = vpop.f32.mrb[0].mxu0
        %v486 = vadd.f32 0.0, %v485
        %v487 = vpop.f32.mrb[0].mxu0
        %v488 = vpop.f32.mrb[0].mxu0
        %v489 = vadd.f32 0.0, %v488
        %v490 = vpop.f32.mrb[0].mxu0
        %491 = vmatprep.mubr.bf16.mxu0 0
        %492 = vmatmul.mubr.bf16.gmra.mrb[0].mxu0 %v337
        %v493 = vpop.f32.mrb[0].mxu0
        %v494 = vadd.f32 0.0, %v493
        %v495 = vpop.f32.mrb[0].mxu0
        %v496 = vpop.f32.mrb[0].mxu0
        %v497 = vadd.f32 0.0, %v496
        %v498 = vpop.f32.mrb[0].mxu0
        %499 = vdwg.mxu0
        %v500 = vpack.c.bf16 %v377, %v374
        %v501 = vpack.c.bf16 %v385, %v382
        %v502 = vpack.c.bf16 %v393, %v390
        %v503 = vpack.c.bf16 %v401, %v398
        %v504 = vpack.c.bf16 %v409, %v406
        %v505 = vpack.c.bf16 %v417, %v414
        %v506 = vpack.c.bf16 %v425, %v422
        %v507 = vpack.c.bf16 %v433, %v430
        %v508 = vpack.c.bf16 %v441, %v438
        %v509 = vpack.c.bf16 %v449, %v446
        %v510 = vpack.c.bf16 %v457, %v454
        %v511 = vpack.c.bf16 %v465, %v462
        %v512 = vpack.c.bf16 %v473, %v470
        %v513 = vpack.c.bf16 %v481, %v478
        %v514 = vpack.c.bf16 %v489, %v486
        %v515 = vpack.c.bf16 %v497, %v494
        %v532 = vunpack.c.l.b16 %v500
        %v533 = vunpack.c.h.b16 %v500
        %v534 = vunpack.c.l.b16 %v501
        %v535 = vunpack.c.h.b16 %v501
        %v536 = vunpack.c.l.b16 %v502
        %v537 = vunpack.c.h.b16 %v502
        %v538 = vunpack.c.l.b16 %v503
        %v539 = vunpack.c.h.b16 %v503
        %v540 = vunpack.c.l.b16 %v504
        %v541 = vunpack.c.h.b16 %v504
        %v542 = vunpack.c.l.b16 %v505
        %v543 = vunpack.c.h.b16 %v505
        %v544 = vunpack.c.l.b16 %v506
        %v545 = vunpack.c.h.b16 %v506
        %v546 = vunpack.c.l.b16 %v507
        %v547 = vunpack.c.h.b16 %v507
        %v548 = vunpack.c.l.b16 %v508
        %v549 = vunpack.c.h.b16 %v508
        %v550 = vunpack.c.l.b16 %v509
        %v551 = vunpack.c.h.b16 %v509
        %v552 = vunpack.c.l.b16 %v510
        %v553 = vunpack.c.h.b16 %v510
        %v554 = vunpack.c.l.b16 %v511
        %v555 = vunpack.c.h.b16 %v511
        %v556 = vunpack.c.l.b16 %v512
        %v557 = vunpack.c.h.b16 %v512
        %v558 = vunpack.c.l.b16 %v513
        %v559 = vunpack.c.h.b16 %v513
        %v560 = vunpack.c.l.b16 %v514
        %v561 = vunpack.c.h.b16 %v514
        %v562 = vunpack.c.l.b16 %v515
        %v563 = vunpack.c.h.b16 %v515
        %v564 = vpack.c.b16 %v532, %v532
        %v565 = vpack.c.b16 %v533, %v533
        %v566 = vpack.c.b16 %v534, %v534
        %v567 = vpack.c.b16 %v535, %v535
        %v568 = vpack.c.b16 %v536, %v536
        %v569 = vpack.c.b16 %v537, %v537
        %v570 = vpack.c.b16 %v538, %v538
        %v571 = vpack.c.b16 %v539, %v539
        %v572 = vpack.c.b16 %v540, %v540
        %v573 = vpack.c.b16 %v541, %v541
        %v574 = vpack.c.b16 %v542, %v542
        %v575 = vpack.c.b16 %v543, %v543
        %v576 = vpack.c.b16 %v544, %v544
        %v577 = vpack.c.b16 %v545, %v545
        %v578 = vpack.c.b16 %v546, %v546
        %v579 = vpack.c.b16 %v547, %v547
        %v580 = vpack.c.b16 %v548, %v548
        %v581 = vpack.c.b16 %v549, %v549
        %v582 = vpack.c.b16 %v550, %v550
        %v583 = vpack.c.b16 %v551, %v551
        %v584 = vpack.c.b16 %v552, %v552
        %v585 = vpack.c.b16 %v553, %v553
        %v586 = vpack.c.b16 %v554, %v554
        %v587 = vpack.c.b16 %v555, %v555
        %v588 = vpack.c.b16 %v556, %v556
        %v589 = vpack.c.b16 %v557, %v557
        %v590 = vpack.c.b16 %v558, %v558
        %v591 = vpack.c.b16 %v559, %v559
        %v592 = vpack.c.b16 %v560, %v560
        %v593 = vpack.c.b16 %v561, %v561
        %v594 = vpack.c.b16 %v562, %v562
        %v595 = vpack.c.b16 %v563, %v563
        %628 = vst [vmem:[%s137] sm:$0xf] %v564
        %629 = vst [vmem:[%s137 + $0x4] sm:$0xf] %v565
        %630 = vst [vmem:[%s137 + $0x8] sm:$0xf] %v566
        %631 = vst [vmem:[%s137 + $0xc] sm:$0xf] %v567
        %632 = vst [vmem:[%s137 + $0x10] sm:$0xf] %v568
        %633 = vst [vmem:[%s137 + $0x14] sm:$0xf] %v569
        %634 = vst [vmem:[%s137 + $0x18] sm:$0xf] %v570
        %635 = vst [vmem:[%s137 + $0x1c] sm:$0xf] %v571
        %636 = vst [vmem:[%s137 + $0x20] sm:$0xf] %v572
        %637 = vst [vmem:[%s137 + $0x24] sm:$0xf] %v573
        %638 = vst [vmem:[%s137 + $0x28] sm:$0xf] %v574
        %639 = vst [vmem:[%s137 + $0x2c] sm:$0xf] %v575
        %640 = vst [vmem:[%s137 + $0x30] sm:$0xf] %v576
        %641 = vst [vmem:[%s137 + $0x34] sm:$0xf] %v577
        %642 = vst [vmem:[%s137 + $0x38] sm:$0xf] %v578
        %643 = vst [vmem:[%s137 + $0x3c] sm:$0xf] %v579
        %644 = vst [vmem:[%s137 + $0x40] sm:$0xf] %v580
        %645 = vst [vmem:[%s137 + $0x44] sm:$0xf] %v581
        %646 = vst [vmem:[%s137 + $0x48] sm:$0xf] %v582
        %647 = vst [vmem:[%s137 + $0x4c] sm:$0xf] %v583
        %648 = vst [vmem:[%s137 + $0x50] sm:$0xf] %v584
        %649 = vst [vmem:[%s137 + $0x54] sm:$0xf] %v585
        %650 = vst [vmem:[%s137 + $0x58] sm:$0xf] %v586
        %651 = vst [vmem:[%s137 + $0x5c] sm:$0xf] %v587
        %652 = vst [vmem:[%s137 + $0x60] sm:$0xf] %v588
        %653 = vst [vmem:[%s137 + $0x64] sm:$0xf] %v589
        %654 = vst [vmem:[%s137 + $0x68] sm:$0xf] %v590
        %655 = vst [vmem:[%s137 + $0x6c] sm:$0xf] %v591
        %656 = vst [vmem:[%s137 + $0x70] sm:$0xf] %v592
        %657 = vst [vmem:[%s137 + $0x74] sm:$0xf] %v593
        %658 = vst [vmem:[%s137 + $0x78] sm:$0xf] %v594
        %659 = vst [vmem:[%s137 + $0x7c] sm:$0xf] %v595
        %s660 = sand.u32 %s71, 1
        %s661 = scalar_lea.sflag [#allocation3], %s660
        %s662 = sand.u32 %s71, 1
        %s663 = smul.addr %s662, 128
        %s664 = scalar_lea.vmem [#allocation2], %s663
        // Predicated region
        $region29: #{tpu_custom_call.1} parent=27 // pred_check
          %p665 = pneg %p81
        $region30: #{tpu_custom_call.1} parent=27 // pred_check_branch
          %667 = sbr.rel (%p665) target = $region32
        $region31: #{tpu_custom_call.1} parent=27 // pred_region
          %s668 = smul.u32 32, %s16
          %s670 = ssub.s32 2048, 2048
          %671 = vsyncadd %s661, %s670
          %s672 = smul.addr %s668, 64
          %s673 = scalar_lea.hbm %s2, %s672
          %s674 = sshll.u32 %s664, 4
          %s675 = int_to_ptr.vmem [resolvable:$true] %s674
          %680 = dma.vmem_to_hbm [thread:$0]  %s675, 2048, %s673, %s661, 64, 64, 4
        $region32: #{tpu_custom_call.1} parent=27 // pred_fallthru
          _
      $region28: #{tpu_custom_call.1} parent=5 // pred_fallthru
        _
      %p681 = scmp.le.s32.totalorder 2, %s11
      // Predicated region
      $region33: #{tpu_custom_call.1} parent=5 // pred_check
        %p682 = pneg %p681
      $region34: #{tpu_custom_call.1} parent=5 // pred_check_branch
        %684 = sbr.rel (%p682) target = $region36
      $region35: #{tpu_custom_call.1} parent=5 // pred_region
        %s685 = ssub.s32 %s11, 2
        // Predicated region
        $region37: #{tpu_custom_call.1} parent=35 // pred_check
          %p686 = pneg %p87
        $region38: #{tpu_custom_call.1} parent=35 // pred_check_branch
          %688 = sbr.rel (%p686) target = $region40
        $region39: #{tpu_custom_call.1} parent=35 // pred_region
          %s689 = sand.u32 %s72, 1
          %s690 = scalar_lea.sflag [#allocation3], %s689
          %s691 = sand.u32 %s72, 1
          %s692 = smul.addr %s691, 128
          %s693 = scalar_lea.vmem [#allocation2], %s692
          %694 = dma.done %s690, 2048
        $region40: #{tpu_custom_call.1} parent=35 // pred_fallthru
          _
      $region36: #{tpu_custom_call.1} parent=5 // pred_fallthru
        _
    $region6: #{tpu_custom_call.1} parent=1 // loop_footer
      %s15 = sadd.s32 1, %s11
    $region7: #{tpu_custom_call.1} parent=1 // loop_footer_branch
      %10 = sbr.rel target = $region3
    $region8: #{tpu_custom_call.1} parent=1 // loop_exit
      _
    %695 = vsyncpa [#allocation3], 1
    %s696 = scalar_lea.sflag [#allocation3], 1
    %697 = vsyncpa %s696, 1

</llo_original>
